<compile_context>
chip_gen: v6e
topology: v6e:2x2x1
jax: 0.10.0
libtpu: 0.0.40
codegen_flags: <defaults>
</compile_context>

<pallas_src>
import jax
import jax.numpy as jnp
from jax import lax
from jax.experimental import pallas as pl
from jax.experimental.pallas import tpu as pltpu


def _round_up(x: int, m: int) -> int:
    return (x + m - 1) // m * m


# -----------------------------------------------------------------------------
# Fused kernel: tiled NN search over the training set + encode() MLP finalize.
# -----------------------------------------------------------------------------
def prior_fused_kernel(codes_ref, traint_ref, tsq_ref, w1_ref, b1_ref,
                       wf_ref, bf_ref, out_ref, minv_ref, win_ref):
    n = pl.program_id(1)                     # train-tile (reduction) axis

    @pl.when(n == 0)
    def _init():
        minv_ref[...] = jnp.full(minv_ref.shape, jnp.inf, minv_ref.dtype)
        win_ref[...] = jnp.zeros(win_ref.shape, win_ref.dtype)

    traint = traint_ref[...]                                   # (D, TN)
    codes = codes_ref[...].astype(traint.dtype)                # (TB, D)

    # argmin-invariant distance:  ||t||^2 - 2 * c . t   (||c||^2 dropped)
    cross = jnp.dot(codes, traint,
                    preferred_element_type=jnp.float32)        # (TB, TN)
    dist = tsq_ref[...] - 2.0 * cross                          # (TB, TN) f32

    # first-occurrence argmin inside this tile (local column index)
    iota = lax.broadcasted_iota(jnp.int32, dist.shape, 1)
    tile_min = jnp.min(dist, axis=-1, keepdims=True)           # (TB, 1)
    tile_idx = jnp.min(
        jnp.where(dist <= tile_min, iota, jnp.iinfo(jnp.int32).max),
        axis=-1, keepdims=True)                                # (TB, 1)

    # extract the candidate winning rows from the tile already in VMEM with an
    # exact one-hot matmul (NT form: contract the lane dim of both operands).
    onehot = (iota == tile_idx).astype(traint.dtype)           # (TB, TN)
    cand = lax.dot_general(onehot, traint, (((1,), (1,)), ((), ())),
                           preferred_element_type=jnp.float32)  # (TB, D)

    # strict '<' keeps the earliest (first-occurrence) winner across tiles
    better = tile_min < minv_ref[...]                          # (TB, 1)
    win_ref[...] = jnp.where(better, cand, win_ref[...])
    minv_ref[...] = jnp.where(better, tile_min, minv_ref[...])

    @pl.when(n == pl.num_programs(1) - 1)
    def _finalize():
        prev = win_ref[...]                                     # (TB, D) f32
        h1 = jnp.maximum(
            jnp.dot(prev, w1_ref[...], preferred_element_type=jnp.float32)
            + b1_ref[...], 0.0)                                 # (TB, H)
        out = (jnp.dot(h1, wf_ref[...], preferred_element_type=jnp.float32)
               + bf_ref[...])                                   # (TB, P)
        out_ref[...] = out.astype(out_ref.dtype)


# -----------------------------------------------------------------------------
# Wrappers
# -----------------------------------------------------------------------------
def prepare_prior_state(train_codes, params, *, block_n=8192,
                        compute_dtype=jnp.float32):
    """One-time (per fit_knn / per training set) static preprocessing.

    Hoists everything that does not depend on the incoming codes out of the
    per-call kernel: the (D, N_pad) pre-transposed / padded training set,
    ||t||^2 (+inf padding), and the fc2_u|fc2_s weight fusion with the fused
    output dim zero-padded to a multiple of 128 lanes (lane-dense final store).

    compute_dtype=jnp.bfloat16 halves the streamed training-set bytes (useful
    for large training sets on every TPU generation); f32 accumulation is kept.
    """
    train_codes = jnp.asarray(train_codes, jnp.float32)
    n, d = train_codes.shape
    assert n >= 1, "need at least one fitted training code"

    block_n = max(128, _round_up(block_n, 128))
    tn = min(block_n, _round_up(n, 128))
    n_pad = _round_up(n, tn)

    # pre-transposed, zero-padded training set: lane-dense MXU RHS
    train_t = jnp.zeros((d, n_pad), jnp.float32).at[:, :n].set(train_codes.T)
    train_t = train_t.astype(compute_dtype)
    t_sq = jnp.sum(train_codes * train_codes, axis=-1)
    t_sq_p = jnp.full((1, n_pad), jnp.inf, jnp.float32).at[0, :n].set(t_sq)

    w1 = jnp.asarray(params["w1"], jnp.float32)
    b1 = jnp.asarray(params["b1"], jnp.float32).reshape(1, -1)
    h = w1.shape[1]

    # fuse fc2_u | fc2_s, pad fused output dim to a multiple of 128 lanes
    wf = jnp.concatenate([params["wu"], params["ws"]], axis=1)   # (H, 2D)
    bf = jnp.concatenate([params["bu"], params["bs"]], axis=1).reshape(1, -1)
    p = _round_up(2 * d, 128)
    if p > 2 * d:
        wf = jnp.pad(wf, ((0, 0), (0, p - 2 * d)))
        bf = jnp.pad(bf, ((0, 0), (0, p - 2 * d)))

    return dict(train_t=train_t, t_sq=t_sq_p, w1=w1, b1=b1,
                wf=jnp.asarray(wf, jnp.float32),
                bf=jnp.asarray(bf, jnp.float32),
                d=d, h=h, p=p, tn=tn, n_pad=n_pad,
                itemsize=jnp.dtype(compute_dtype).itemsize)


def prior_network_forward(codes, state):
    """codes: (B, code_length) f32 -> (mu, logstd), each (B, code_length)."""
    codes = jnp.asarray(codes, jnp.float32)
    b, d = codes.shape
    assert d == state["d"]
    tn, n_pad, p, h = state["tn"], state["n_pad"], state["p"], state["h"]

    # pad / tile the query batch (sublane multiple; leading "parallel" axis)
    b_pad = _round_up(b, 8)
    tb = b_pad if b_pad <= 256 else 256
    b_pad = _round_up(b_pad, tb)
    if b_pad == b:
        codes_p = codes
    else:
        codes_p = jnp.zeros((b_pad, d), jnp.float32).at[:b].set(codes)

    grid = (b_pad // tb, n_pad // tn)

    # scoped-VMEM budget: double-buffered streamed tiles + resident operands,
    # with generous slack; capped so it also fits v7x's 64 MiB VMEM.
    tile_bytes = tn * (d * state["itemsize"] + 4)
    resident = (tb * d + tb * p + d * h + h + h * p + p + tb * (d + 1)) * 4
    vmem_limit = int(min(48 * 2 ** 20,
                         max(32 * 2 ** 20, 4 * tile_bytes + 4 * resident)))

    out = pl.pallas_call(
        prior_fused_kernel,
        out_shape=jax.ShapeDtypeStruct((b_pad, p), jnp.float32),
        grid_spec=pltpu.PrefetchScalarGridSpec(
            num_scalar_prefetch=0,
            grid=grid,
            in_specs=[
                pl.BlockSpec((tb, d), lambda i, n: (i, 0)),   # query tile (resident over n)
                pl.BlockSpec((d, tn), lambda i, n: (0, n)),   # train^T tile (streamed)
                pl.BlockSpec((1, tn), lambda i, n: (0, n)),   # ||t||^2 tile (streamed)
                pl.BlockSpec((d, h), lambda i, n: (0, 0)),    # fc1 weight (resident)
                pl.BlockSpec((1, h), lambda i, n: (0, 0)),    # fc1 bias
                pl.BlockSpec((h, p), lambda i, n: (0, 0)),    # fused fc2_u|fc2_s weight
                pl.BlockSpec((1, p), lambda i, n: (0, 0)),    # fused fc2_u|fc2_s bias
            ],
            out_specs=pl.BlockSpec((tb, p), lambda i, n: (i, 0)),
            scratch_shapes=[pltpu.VMEM((tb, 1), jnp.float32),   # running min dist
                            pltpu.VMEM((tb, d), jnp.float32)],  # running winner row
        ),
        compiler_params=pltpu.CompilerParams(
            dimension_semantics=("parallel", "arbitrary"),
            vmem_limit_bytes=vmem_limit),
    )(codes_p, state["train_t"], state["t_sq"], state["w1"], state["b1"],
      state["wf"], state["bf"])

    mu = out[:b, :d]
    logstd = out[:b, d:2 * d]
    return mu, logstd


def init_params(key, code_length, n_hidden):
    ks = jax.random.split(key, 6)
    s1 = 1.0 / jnp.sqrt(code_length)
    s2 = 1.0 / jnp.sqrt(n_hidden)
    return {
        # weights stored as (in, out) (transpose of torch nn.Linear layout)
        "w1": jax.random.uniform(ks[0], (code_length, n_hidden), jnp.float32, -s1, s1),
        "b1": jax.random.uniform(ks[1], (1, n_hidden), jnp.float32, -s1, s1),
        "wu": jax.random.uniform(ks[2], (n_hidden, code_length), jnp.float32, -s2, s2),
        "bu": jax.random.uniform(ks[3], (1, code_length), jnp.float32, -s2, s2),
        "ws": jax.random.uniform(ks[4], (n_hidden, code_length), jnp.float32, -s2, s2),
        "bs": jax.random.uniform(ks[5], (1, code_length), jnp.float32, -s2, s2),
    }


def reference_forward(codes, train_codes, params):
    # pure-JAX reference of the same (eval-mode) semantics
    dist = (jnp.sum(codes ** 2, -1, keepdims=True)
            - 2.0 * codes @ train_codes.T
            + jnp.sum(train_codes ** 2, -1)[None, :])
    idx = jnp.argmin(dist, axis=-1)
    prev = train_codes[idx]
    h1 = jnp.maximum(prev @ params["w1"] + params["b1"], 0.0)
    mu = h1 @ params["wu"] + params["bu"]
    logstd = h1 @ params["ws"] + params["bs"]
    return mu, logstd


if __name__ == "__main__":
    B = 8       # batch of incoming codes
    N = 300     # size_training_set (exercises N padding: 300 -> 384)
    D = 32      # code_length
    H = 128     # n_hidden (small, lane-aligned)

    key = jax.random.PRNGKey(0)
    k_codes, k_train, k_params = jax.random.split(key, 3)

    codes = jax.random.normal(k_codes, (B, D), jnp.float32)
    # stand-in for self.rdn.standard_normal((size_training_set, code_length))
    train_codes = jax.random.normal(k_train, (N, D), jnp.float32)
    params = init_params(k_params, D, H)

    mu_ref, ls_ref = reference_forward(codes, train_codes, params)

    # Tolerance covers MXU f32-emulation rounding of the in-kernel matmuls
    # (the reference gathers the winner row by indexing, the kernel via the
    # exact one-hot MXU matmul); the neighbor choice itself is exact.
    ATOL = RTOL = 2e-3

    # 1) single train tile (N_pad <= default block_n)
    state = prepare_prior_state(train_codes, params)
    mu, logstd = prior_network_forward(codes, state)
    jax.block_until_ready((mu, logstd))
    assert mu.shape == (B, D) and logstd.shape == (B, D)
    assert jnp.allclose(mu, mu_ref, atol=ATOL, rtol=RTOL)
    assert jnp.allclose(logstd, ls_ref, atol=ATOL, rtol=RTOL)

    # 2) multi-tile reduction over the training set (exercises the cross-tile
    #    running-min / winner-row accumulator merge: 300 -> 3 tiles of 128)
    state_tiled = prepare_prior_state(train_codes, params, block_n=128)
    mu_t, ls_t = prior_network_forward(codes, state_tiled)
    jax.block_until_ready((mu_t, ls_t))
    assert jnp.allclose(mu_t, mu_ref, atol=ATOL, rtol=RTOL)
    assert jnp.allclose(ls_t, ls_ref, atol=ATOL, rtol=RTOL)

    # 3) non-multiple-of-8 query batch exercises the query-padding path
    mu_5, ls_5 = prior_network_forward(codes[:5], state)
    jax.block_until_ready((mu_5, ls_5))
    mu5_ref, ls5_ref = reference_forward(codes[:5], train_codes, params)
    assert jnp.allclose(mu_5, mu5_ref, atol=ATOL, rtol=RTOL)
    assert jnp.allclose(ls_5, ls5_ref, atol=ATOL, rtol=RTOL)

    print("KERNEL_OK")
</pallas_src>

<mosaic_0001>
module attributes {stable_mosaic.version = 11 : i64} {
  func.func @prior_fused_kernel(%arg0: i32, %arg1: i32, %arg2: memref<8x32xf32, #tpu.memory_space<vmem>>, %arg3: memref<32x384xf32, #tpu.memory_space<vmem>>, %arg4: memref<1x384xf32, #tpu.memory_space<vmem>>, %arg5: memref<32x128xf32, #tpu.memory_space<vmem>>, %arg6: memref<1x128xf32, #tpu.memory_space<vmem>>, %arg7: memref<128x128xf32, #tpu.memory_space<vmem>>, %arg8: memref<1x128xf32, #tpu.memory_space<vmem>>, %arg9: memref<8x128xf32, #tpu.memory_space<vmem>>, %arg10: memref<8x1xf32, #tpu.memory_space<vmem>>, %arg11: memref<8x32xf32, #tpu.memory_space<vmem>>) attributes {dimension_semantics = [#tpu.dimension_semantics<parallel>, #tpu.dimension_semantics<arbitrary>], iteration_bounds = array<i64: 1, 1>, scalar_prefetch = 0 : i64, scratch_operands = 2 : i64, tpu.core_type = #tpu.core_type<tc>, window_params = [{transform_indices = @transform_0, window_bounds = array<i64: 8, 32>}, {transform_indices = @transform_1, window_bounds = array<i64: 32, 384>}, {transform_indices = @transform_2, window_bounds = array<i64: 1, 384>}, {pipeline_mode = #tpu.pipeline_mode<synchronous>, transform_indices = @transform_3, window_bounds = array<i64: 32, 128>}, {pipeline_mode = #tpu.pipeline_mode<synchronous>, transform_indices = @transform_4, window_bounds = array<i64: 1, 128>}, {pipeline_mode = #tpu.pipeline_mode<synchronous>, transform_indices = @transform_5, window_bounds = array<i64: 128, 128>}, {pipeline_mode = #tpu.pipeline_mode<synchronous>, transform_indices = @transform_6, window_bounds = array<i64: 1, 128>}, {transform_indices = @transform_7, window_bounds = array<i64: 8, 128>}]} {
    %c0_i32 = arith.constant 0 : i32
    %0 = arith.cmpi eq, %arg1, %c0_i32 : i32
    %1 = arith.extui %0 : i1 to i32
    %c0_i32_0 = arith.constant 0 : i32
    %2 = arith.cmpi ne, %1, %c0_i32_0 : i32
    scf.if %2 {
      %cst_22 = arith.constant 0x7F800000 : f32
      %38 = vector.broadcast %cst_22 : f32 to vector<8x1xf32>
      %c0_23 = arith.constant 0 : index
      %c0_24 = arith.constant 0 : index
      %39 = vector.load %arg10[%c0_23, %c0_24] : memref<8x1xf32, #tpu.memory_space<vmem>>, vector<8x1xf32>
      tpu.vector_store %arg10[%c0_23, %c0_24], %38 {strides = array<i32>} : memref<8x1xf32, #tpu.memory_space<vmem>>, vector<8x1xf32>,
      %cst_25 = arith.constant 0.000000e+00 : f32
      %40 = vector.broadcast %cst_25 : f32 to vector<8x32xf32>
      %c0_26 = arith.constant 0 : index
      %c0_27 = arith.constant 0 : index
      %41 = vector.load %arg11[%c0_26, %c0_27] : memref<8x32xf32, #tpu.memory_space<vmem>>, vector<8x32xf32>
      tpu.vector_store %arg11[%c0_26, %c0_27], %40 {strides = array<i32>} : memref<8x32xf32, #tpu.memory_space<vmem>>, vector<8x32xf32>,
    } else {
    }
    %c0 = arith.constant 0 : index
    %c0_1 = arith.constant 0 : index
    %3 = vector.load %arg3[%c0, %c0_1] : memref<32x384xf32, #tpu.memory_space<vmem>>, vector<32x384xf32>
    %c0_2 = arith.constant 0 : index
    %c0_3 = arith.constant 0 : index
    %4 = vector.load %arg2[%c0_2, %c0_3] : memref<8x32xf32, #tpu.memory_space<vmem>>, vector<8x32xf32>
    %cst = arith.constant dense<0.000000e+00> : vector<8x384xf32>
    %5 = tpu.matmul %4, %3, %cst {dimension_numbers = #tpu.dot_dimension_numbers<[1], [0], [0], [1], [0, 0, 1, 1], [], []>} : vector<8x32xf32>, vector<32x384xf32>, vector<8x384xf32> -> vector<8x384xf32>
    %c0_4 = arith.constant 0 : index
    %c0_5 = arith.constant 0 : index
    %6 = vector.load %arg4[%c0_4, %c0_5] : memref<1x384xf32, #tpu.memory_space<vmem>>, vector<1x384xf32>
    %cst_6 = arith.constant 2.000000e+00 : f32
    %7 = vector.broadcast %cst_6 : f32 to vector<8x384xf32>
    %8 = arith.mulf %7, %5 : vector<8x384xf32>
    %9 = vector.broadcast %6 : vector<1x384xf32> to vector<8x384xf32>
    %10 = arith.subf %9, %8 : vector<8x384xf32>
    %11 = tpu.iota {dimensions = array<i32: 1>} : vector<8x384xi32>
    %cst_7 = arith.constant dense<0x7F800000> : vector<8xf32>
    %12 = vector.multi_reduction <minimumf>, %10, %cst_7 [1] : vector<8x384xf32> to vector<8xf32>
    %13 = vector.shape_cast %12 : vector<8xf32> to vector<8x1xf32>
    %14 = vector.broadcast %13 : vector<8x1xf32> to vector<8x384xf32>
    %15 = arith.cmpf ole, %10, %14 : vector<8x384xf32>
    %c2147483647_i32 = arith.constant 2147483647 : i32
    %16 = vector.broadcast %c2147483647_i32 : i32 to vector<8x384xi32>
    %17 = arith.select %15, %11, %16 : vector<8x384xi1>, vector<8x384xi32>
    %cst_8 = arith.constant dense<2147483647> : vector<8xi32>
    %18 = vector.multi_reduction <minsi>, %17, %cst_8 [1] : vector<8x384xi32> to vector<8xi32>
    %19 = vector.shape_cast %18 : vector<8xi32> to vector<8x1xi32>
    %20 = vector.broadcast %19 : vector<8x1xi32> to vector<8x384xi32>
    %21 = arith.cmpi eq, %11, %20 : vector<8x384xi32>
    %22 = arith.extui %21 : vector<8x384xi1> to vector<8x384xi32>
    %23 = arith.sitofp %22 : vector<8x384xi32> to vector<8x384xf32>
    %cst_9 = arith.constant dense<0.000000e+00> : vector<8x32xf32>
    %24 = tpu.matmul %23, %3, %cst_9 {dimension_numbers = #tpu.dot_dimension_numbers<[1], [1], [0], [0], [0, 0, 1, 0], [], []>} : vector<8x384xf32>, vector<32x384xf32>, vector<8x32xf32> -> vector<8x32xf32>
    %c0_10 = arith.constant 0 : index
    %c0_11 = arith.constant 0 : index
    %25 = vector.load %arg10[%c0_10, %c0_11] : memref<8x1xf32, #tpu.memory_space<vmem>>, vector<8x1xf32>
    %26 = arith.cmpf olt, %13, %25 : vector<8x1xf32>
    %c0_12 = arith.constant 0 : index
    %c0_13 = arith.constant 0 : index
    %27 = vector.load %arg11[%c0_12, %c0_13] : memref<8x32xf32, #tpu.memory_space<vmem>>, vector<8x32xf32>
    %28 = vector.shape_cast %26 : vector<8x1xi1> to vector<8x1xi1>
    %29 = vector.broadcast %28 : vector<8x1xi1> to vector<8x32xi1>
    %30 = arith.select %29, %24, %27 : vector<8x32xi1>, vector<8x32xf32>
    %c0_14 = arith.constant 0 : index
    %c0_15 = arith.constant 0 : index
    %31 = vector.load %arg11[%c0_14, %c0_15] : memref<8x32xf32, #tpu.memory_space<vmem>>, vector<8x32xf32>
    tpu.vector_store %arg11[%c0_14, %c0_15], %30 {strides = array<i32>} : memref<8x32xf32, #tpu.memory_space<vmem>>, vector<8x32xf32>,
    %c0_16 = arith.constant 0 : index
    %c0_17 = arith.constant 0 : index
    %32 = vector.load %arg10[%c0_16, %c0_17] : memref<8x1xf32, #tpu.memory_space<vmem>>, vector<8x1xf32>
    %33 = arith.select %26, %13, %32 : vector<8x1xi1>, vector<8x1xf32>
    %c0_18 = arith.constant 0 : index
    %c0_19 = arith.constant 0 : index
    %34 = vector.load %arg10[%c0_18, %c0_19] : memref<8x1xf32, #tpu.memory_space<vmem>>, vector<8x1xf32>
    tpu.vector_store %arg10[%c0_18, %c0_19], %33 {strides = array<i32>} : memref<8x1xf32, #tpu.memory_space<vmem>>, vector<8x1xf32>,
    %c0_i32_20 = arith.constant 0 : i32
    %35 = arith.cmpi eq, %arg1, %c0_i32_20 : i32
    %36 = arith.extui %35 : i1 to i32
    %c0_i32_21 = arith.constant 0 : i32
    %37 = arith.cmpi ne, %36, %c0_i32_21 : i32
    scf.if %37 {
      %c0_22 = arith.constant 0 : index
      %c0_23 = arith.constant 0 : index
      %38 = vector.load %arg11[%c0_22, %c0_23] : memref<8x32xf32, #tpu.memory_space<vmem>>, vector<8x32xf32>
      %c0_24 = arith.constant 0 : index
      %c0_25 = arith.constant 0 : index
      %39 = vector.load %arg5[%c0_24, %c0_25] : memref<32x128xf32, #tpu.memory_space<vmem>>, vector<32x128xf32>
      %cst_26 = arith.constant dense<0.000000e+00> : vector<8x128xf32>
      %40 = tpu.matmul %38, %39, %cst_26 {dimension_numbers = #tpu.dot_dimension_numbers<[1], [0], [0], [1], [0, 0, 1, 1], [], []>} : vector<8x32xf32>, vector<32x128xf32>, vector<8x128xf32> -> vector<8x128xf32>
      %c0_27 = arith.constant 0 : index
      %c0_28 = arith.constant 0 : index
      %41 = vector.load %arg6[%c0_27, %c0_28] : memref<1x128xf32, #tpu.memory_space<vmem>>, vector<1x128xf32>
      %42 = vector.broadcast %41 : vector<1x128xf32> to vector<8x128xf32>
      %43 = arith.addf %40, %42 : vector<8x128xf32>
      %cst_29 = arith.constant 0.000000e+00 : f32
      %44 = vector.broadcast %cst_29 : f32 to vector<8x128xf32>
      %45 = arith.maximumf %43, %44 : vector<8x128xf32>
      %c0_30 = arith.constant 0 : index
      %c0_31 = arith.constant 0 : index
      %46 = vector.load %arg7[%c0_30, %c0_31] : memref<128x128xf32, #tpu.memory_space<vmem>>, vector<128x128xf32>
      %cst_32 = arith.constant dense<0.000000e+00> : vector<8x128xf32>
      %47 = tpu.matmul %45, %46, %cst_32 {dimension_numbers = #tpu.dot_dimension_numbers<[1], [0], [0], [1], [0, 0, 1, 1], [], []>} : vector<8x128xf32>, vector<128x128xf32>, vector<8x128xf32> -> vector<8x128xf32>
      %c0_33 = arith.constant 0 : index
      %c0_34 = arith.constant 0 : index
      %48 = vector.load %arg8[%c0_33, %c0_34] : memref<1x128xf32, #tpu.memory_space<vmem>>, vector<1x128xf32>
      %49 = vector.broadcast %48 : vector<1x128xf32> to vector<8x128xf32>
      %50 = arith.addf %47, %49 : vector<8x128xf32>
      %c0_35 = arith.constant 0 : index
      %c0_36 = arith.constant 0 : index
      %51 = vector.load %arg9[%c0_35, %c0_36] : memref<8x128xf32, #tpu.memory_space<vmem>>, vector<8x128xf32>
      tpu.vector_store %arg9[%c0_35, %c0_36], %50 {strides = array<i32>} : memref<8x128xf32, #tpu.memory_space<vmem>>, vector<8x128xf32>,
    } else {
    }
    return
  }
  func.func @transform_0(%arg0: i32, %arg1: i32) -> (i32, i32) {
    %c0_i32 = arith.constant 0 : i32
    %c0_i32_0 = arith.constant 0 : i32
    return %arg0, %c0_i32 : i32, i32
  }
  func.func @transform_1(%arg0: i32, %arg1: i32) -> (i32, i32) {
    %c0_i32 = arith.constant 0 : i32
    %c0_i32_0 = arith.constant 0 : i32
    return %c0_i32, %arg1 : i32, i32
  }
  func.func @transform_2(%arg0: i32, %arg1: i32) -> (i32, i32) {
    %c0_i32 = arith.constant 0 : i32
    %c0_i32_0 = arith.constant 0 : i32
    return %c0_i32, %arg1 : i32, i32
  }
  func.func @transform_3(%arg0: i32, %arg1: i32) -> (i32, i32) {
    %c0_i32 = arith.constant 0 : i32
    %c0_i32_0 = arith.constant 0 : i32
    %c0_i32_1 = arith.constant 0 : i32
    return %c0_i32, %c0_i32_0 : i32, i32
  }
  func.func @transform_4(%arg0: i32, %arg1: i32) -> (i32, i32) {
    %c0_i32 = arith.constant 0 : i32
    %c0_i32_0 = arith.constant 0 : i32
    %c0_i32_1 = arith.constant 0 : i32
    return %c0_i32, %c0_i32_0 : i32, i32
  }
  func.func @transform_5(%arg0: i32, %arg1: i32) -> (i32, i32) {
    %c0_i32 = arith.constant 0 : i32
    %c0_i32_0 = arith.constant 0 : i32
    %c0_i32_1 = arith.constant 0 : i32
    return %c0_i32, %c0_i32_0 : i32, i32
  }
  func.func @transform_6(%arg0: i32, %arg1: i32) -> (i32, i32) {
    %c0_i32 = arith.constant 0 : i32
    %c0_i32_0 = arith.constant 0 : i32
    %c0_i32_1 = arith.constant 0 : i32
    return %c0_i32, %c0_i32_0 : i32, i32
  }
  func.func @transform_7(%arg0: i32, %arg1: i32) -> (i32, i32) {
    %c0_i32 = arith.constant 0 : i32
    %c0_i32_0 = arith.constant 0 : i32
    return %arg0, %c0_i32 : i32, i32
  }
}

</mosaic_0001>

<llo_original>
// kernel: tpu_custom_call.1
$region0: #{tpu_custom_call.1}
  #allocation0 [shape = 'u32[]', space=smem, size = 0x4, offset = 0x4, fixed_abs, tag = 'smem constant byte address 0x4 - core index']
  #allocation1 [shape = 'u32[144,128]{1,0:T(1,128)}', space=vmem, size = 0x12000, scoped, tag = 'internal scratch']
  #allocation2 [shape = 'f32[8,1]{1,0:T(8,128)}', space=vmem, size = 0x1000, scoped, tag = 'scratch operand']
  #allocation3 [shape = 'f32[8,32]{1,0:T(8,128)}', space=vmem, size = 0x1000, scoped, tag = 'scratch operand']
  %s0 = inlined_call_operand.hbm [shape: f32[8,32], index: 0, kind: input, shape index: {}]
  %s1 = inlined_call_operand.hbm [shape: f32[32,384], index: 1, kind: input, shape index: {}]
  %s2 = inlined_call_operand.vmem [shape: f32[1,384], index: 2, kind: input, shape index: {}]
  %s3 = inlined_call_operand.hbm [shape: f32[32,128], index: 3, kind: input, shape index: {}]
  %s4 = inlined_call_operand.vmem [shape: f32[1,128], index: 4, kind: input, shape index: {}]
  %s5 = inlined_call_operand.hbm [shape: f32[128,128], index: 5, kind: input, shape index: {}]
  %s6 = inlined_call_operand.vmem [shape: f32[1,128], index: 6, kind: input, shape index: {}]
  %s7 = inlined_call_operand.hbm [shape: f32[8,128], index: 7, kind: output, shape index: {}]
  %s8 = sld [smem:[#allocation0]]
  $region62: #{tpu_custom_call.1} parent=0
    _
  %s10 = ssub.s32 1, %s8
  %s11 = scalar_select 0, %s10, %s8
  $region1: #{tpu_custom_call.1} parent=0
    #allocation4 [shape = 'u8[4096]{0}', space=vmem, size = 0x1000, scoped, tag = 'input window, operand 0, single buffered']
    #allocation5 [shape = 's32[1]{0}', space=sflag, size = 0x4, scoped, tag = 'scoped memory for tpu_custom_call.1']
    #allocation6 [shape = 's32[1]{0}', space=sflag, size = 0x4, scoped, tag = 'scoped memory for tpu_custom_call.1']
    #allocation7 [shape = 'u8[49152]{0}', space=vmem, size = 0xc000, scoped, tag = 'input window, operand 1, single buffered']
    #allocation8 [shape = 's32[1]{0}', space=sflag, size = 0x4, scoped, tag = 'scoped memory for tpu_custom_call.1']
    #allocation9 [shape = 'u8[16384]{0}', space=vmem, size = 0x4000, scoped, tag = 'input window, operand 3, single buffered']
    #allocation10 [shape = 'u8[65536]{0}', space=vmem, size = 0x10000, scoped, tag = 'input window, operand 5, single buffered']
    #allocation11 [shape = 's32[1]{0}', space=sflag, size = 0x4, scoped, tag = 'scoped memory for tpu_custom_call.1']
    #allocation12 [shape = 'u8[4096]{0}', space=vmem, size = 0x1000, scoped, tag = 'output window, operand 0, single buffered']
    %12 = vsyncpa [#allocation5], 0
    %13 = vsyncpa [#allocation8], 0
    %14 = vsyncpa [#allocation11], 0
    %15 = vsyncpa [#allocation6], 0
    // Predicated region
    $region2: #{tpu_custom_call.1} parent=1 // pred_check
      _
    $region3: #{tpu_custom_call.1} parent=1 // pred_check_branch
      %17 = sbr.rel (0) target = $region5
    $region4: #{tpu_custom_call.1} parent=1 // pred_region
      %s19 = ssub.s32 128, 128
      %20 = vsyncadd [#allocation5], %s19
      %s22 = sshll.u32 [#allocation4], 4
      %s23 = int_to_ptr.vmem [resolvable:$true] %s22
      %25 = dma.hbm_to_vmem [thread:$0]  %s0, 128, %s23, [#allocation5]
    $region5: #{tpu_custom_call.1} parent=1 // pred_fallthru
      _
    // Predicated region
    $region6: #{tpu_custom_call.1} parent=1 // pred_check
      _
    $region7: #{tpu_custom_call.1} parent=1 // pred_check_branch
      %27 = sbr.rel (0) target = $region9
    $region8: #{tpu_custom_call.1} parent=1 // pred_region
      %s29 = ssub.s32 1536, 1536
      %30 = vsyncadd [#allocation8], %s29
      %s31 = sshll.u32 [#allocation7], 4
      %s32 = int_to_ptr.vmem [resolvable:$true] %s31
      %37 = dma.hbm_to_vmem [thread:$0]  %s1, 1536, %s32, [#allocation8], 384, 384, 24
    $region9: #{tpu_custom_call.1} parent=1 // pred_fallthru
      _
    // Predicated region
    $region10: #{tpu_custom_call.1} parent=1 // pred_check
      _
    $region11: #{tpu_custom_call.1} parent=1 // pred_check_branch
      %39 = sbr.rel (0) target = $region13
    $region12: #{tpu_custom_call.1} parent=1 // pred_region
      _
    $region13: #{tpu_custom_call.1} parent=1 // pred_fallthru
      _
    // Predicated region
    $region14: #{tpu_custom_call.1} parent=1 // pred_check
      _
    $region15: #{tpu_custom_call.1} parent=1 // pred_check_branch
      %41 = sbr.rel (0) target = $region17
    $region16: #{tpu_custom_call.1} parent=1 // pred_region
      %s43 = ssub.s32 512, 512
      %44 = vsyncadd [#allocation8], %s43
      %s45 = sshll.u32 [#allocation9], 4
      %s46 = int_to_ptr.vmem [resolvable:$true] %s45
      %51 = dma.hbm_to_vmem [thread:$0]  %s3, 512, %s46, [#allocation8], 128, 128, 8
    $region17: #{tpu_custom_call.1} parent=1 // pred_fallthru
      _
    // Predicated region
    $region18: #{tpu_custom_call.1} parent=1 // pred_check
      _
    $region19: #{tpu_custom_call.1} parent=1 // pred_check_branch
      %53 = sbr.rel (0) target = $region21
    $region20: #{tpu_custom_call.1} parent=1 // pred_region
      _
    $region21: #{tpu_custom_call.1} parent=1 // pred_fallthru
      _
    // Predicated region
    $region22: #{tpu_custom_call.1} parent=1 // pred_check
      _
    $region23: #{tpu_custom_call.1} parent=1 // pred_check_branch
      %55 = sbr.rel (0) target = $region25
    $region24: #{tpu_custom_call.1} parent=1 // pred_region
      %s57 = ssub.s32 2048, 2048
      %58 = vsyncadd [#allocation11], %s57
      %s59 = sshll.u32 [#allocation10], 4
      %s60 = int_to_ptr.vmem [resolvable:$true] %s59
      %65 = dma.hbm_to_vmem [thread:$0]  %s5, 2048, %s60, [#allocation11], 128, 128, 8
    $region25: #{tpu_custom_call.1} parent=1 // pred_fallthru
      _
    // Predicated region
    $region26: #{tpu_custom_call.1} parent=1 // pred_check
      _
    $region27: #{tpu_custom_call.1} parent=1 // pred_check_branch
      %67 = sbr.rel (0) target = $region29
    $region28: #{tpu_custom_call.1} parent=1 // pred_region
      _
    $region29: #{tpu_custom_call.1} parent=1 // pred_fallthru
      _
    // Predicated region
    $region30: #{tpu_custom_call.1} parent=1 // pred_check
      _
    $region31: #{tpu_custom_call.1} parent=1 // pred_check_branch
      %69 = sbr.rel (0) target = $region33
    $region32: #{tpu_custom_call.1} parent=1 // pred_region
      %70 = dma.done [#allocation5], 128
    $region33: #{tpu_custom_call.1} parent=1 // pred_fallthru
      _
    // Predicated region
    $region34: #{tpu_custom_call.1} parent=1 // pred_check
      _
    $region35: #{tpu_custom_call.1} parent=1 // pred_check_branch
      %72 = sbr.rel (0) target = $region37
    $region36: #{tpu_custom_call.1} parent=1 // pred_region
      %73 = dma.done [#allocation8], 1536
    $region37: #{tpu_custom_call.1} parent=1 // pred_fallthru
      _
    // Predicated region
    $region38: #{tpu_custom_call.1} parent=1 // pred_check
      _
    $region39: #{tpu_custom_call.1} parent=1 // pred_check_branch
      %75 = sbr.rel (0) target = $region41
    $region40: #{tpu_custom_call.1} parent=1 // pred_region
      %76 = dma.done [#allocation8], 512
    $region41: #{tpu_custom_call.1} parent=1 // pred_fallthru
      _
    // Predicated region
    $region42: #{tpu_custom_call.1} parent=1 // pred_check
      _
    $region43: #{tpu_custom_call.1} parent=1 // pred_check_branch
      %78 = sbr.rel (0) target = $region45
    $region44: #{tpu_custom_call.1} parent=1 // pred_region
      %79 = dma.done [#allocation11], 2048
    $region45: #{tpu_custom_call.1} parent=1 // pred_fallthru
      _
    %p80 = scmp.eq.s32.totalorder 0, 0
    // Predicated region
    $region46: #{tpu_custom_call.1} parent=1 // pred_check
      %p81 = pneg %p80
    $region47: #{tpu_custom_call.1} parent=1 // pred_check_branch
      %83 = sbr.rel (%p81) target = $region49
    $region48: #{tpu_custom_call.1} parent=1 // pred_region
      %vm84 = vcmask 7168
      %85 = vst.msk [vmem:[#allocation2] sm:$0xff] %vm84, inf
      %vm86 = vcmask 261120
      %87 = vst.msk [vmem:[#allocation3] sm:$0xff] %vm86, 0.0
    $region49: #{tpu_custom_call.1} parent=1 // pred_fallthru
      _
    %v88 = vld [vmem:[#allocation7] sm:$0xff]
    %v89 = vld [vmem:[#allocation7 + $0x8] sm:$0xff]
    %v90 = vld [vmem:[#allocation7 + $0x10] sm:$0xff]
    %v91 = vld [vmem:[#allocation7 + $0x18] sm:$0xff]
    %v92 = vld [vmem:[#allocation7 + $0x20] sm:$0xff]
    %v93 = vld [vmem:[#allocation7 + $0x28] sm:$0xff]
    %v94 = vld [vmem:[#allocation7 + $0x30] sm:$0xff]
    %v95 = vld [vmem:[#allocation7 + $0x38] sm:$0xff]
    %v96 = vld [vmem:[#allocation7 + $0x40] sm:$0xff]
    %v97 = vld [vmem:[#allocation7 + $0x48] sm:$0xff]
    %v98 = vld [vmem:[#allocation7 + $0x50] sm:$0xff]
    %v99 = vld [vmem:[#allocation7 + $0x58] sm:$0xff]
    %v100 = vld [vmem:[#allocation4] sm:$0xff]
    %vm101 = vcmask 261120
    %v103 = vsel %vm101, %v100, 0
    %105 = vmatprep.subr.mxu0 0.0
    %106 = vmatpush1.msra.mxu0 0.0
    %107 = vmatprep.subr.mxu0 0.0
    %108 = vmatpush1.msra.mxu0 0.0
    %109 = vmatprep.subr.mxu0 0.0
    %110 = vmatpush1.msra.mxu0 0.0
    %111 = vmatprep.subr.mxu0 0.0
    %112 = vmatpush1.msra.mxu0 0.0
    %113 = vmatprep.subr.mxu0 0.0
    %114 = vmatpush1.msra.mxu0 0.0
    %115 = vmatprep.subr.mxu0 0.0
    %116 = vmatpush1.msra.mxu0 0.0
    %117 = vmatprep.subr.mxu0 0.0
    %118 = vmatpush1.msra.mxu0 0.0
    %119 = vmatprep.subr.mxu0 0.0
    %120 = vmatpush1.msra.mxu0 0.0
    %121 = vmatprep.subr.mxu0 0.0
    %122 = vmatpush1.msra.mxu0 0.0
    %123 = vmatprep.subr.mxu0 0.0
    %124 = vmatpush1.msra.mxu0 0.0
    %125 = vmatprep.subr.mxu0 0.0
    %126 = vmatpush1.msra.mxu0 0.0
    %127 = vmatprep.subr.mxu0 0.0
    %128 = vmatpush1.msra.mxu0 0.0
    %129 = vmatprep.subr.mxu0 %v98
    %130 = vmatpush1.msra.mxu0 %v97
    %131 = vmatprep.subr.mxu0 %v95
    %132 = vmatpush1.msra.mxu0 %v94
    %133 = vmatprep.subr.mxu0 %v92
    %134 = vmatpush1.msra.mxu0 %v91
    %135 = vmatprep.subr.mxu0 %v89
    %136 = vmatpush1.msra.mxu0 %v88
    %137 = vmatprep.subr.mxu0 0.0
    %138 = vmatpush2.msra.mxu0 0.0
    %139 = vmatprep.subr.mxu0 0.0
    %140 = vmatpush2.msra.mxu0 0.0
    %141 = vmatprep.subr.mxu0 0.0
    %142 = vmatpush2.msra.mxu0 0.0
    %143 = vmatprep.subr.mxu0 0.0
    %144 = vmatpush2.msra.mxu0 0.0
    %145 = vmatprep.subr.mxu0 0.0
    %146 = vmatpush2.msra.mxu0 0.0
    %147 = vmatprep.subr.mxu0 0.0
    %148 = vmatpush2.msra.mxu0 0.0
    %149 = vmatprep.subr.mxu0 0.0
    %150 = vmatpush2.msra.mxu0 0.0
    %151 = vmatprep.subr.mxu0 0.0
    %152 = vmatpush2.msra.mxu0 0.0
    %153 = vmatprep.subr.mxu0 0.0
    %154 = vmatpush2.msra.mxu0 0.0
    %155 = vmatprep.subr.mxu0 0.0
    %156 = vmatpush2.msra.mxu0 0.0
    %157 = vmatprep.subr.mxu0 0.0
    %158 = vmatpush2.msra.mxu0 0.0
    %159 = vmatprep.subr.mxu0 0.0
    %160 = vmatpush2.msra.mxu0 0.0
    %161 = vmatprep.subr.mxu0 0.0
    %162 = vmatpush2.msra.mxu0 0.0
    %163 = vmatprep.subr.mxu0 0.0
    %164 = vmatpush2.msra.mxu0 0.0
    %165 = vmatprep.subr.mxu0 0.0
    %166 = vmatpush2.msra.mxu0 0.0
    %167 = vmatprep.subr.mxu0 0.0
    %168 = vmatpush2.msra.mxu0 0.0
    %169 = vmatprep.mubr.f32.mxu0 0.0
    %170 = vmatmul.mubr.f32.gmra.mxu0 %v103
    %v171 = vpop.f32.mrf.mxu0
    %v172 = vadd.f32 0.0, %v171
    %v173 = vpop.f32.mrf.mxu0
    %v174 = vadd.f32 0.0, %v173
    %175 = vdwg.mxu0
    %176 = vmatprep.subr.mxu0 0.0
    %177 = vmatpush1.msra.mxu0 0.0
    %178 = vmatprep.subr.mxu0 0.0
    %179 = vmatpush1.msra.mxu0 0.0
    %180 = vmatprep.subr.mxu0 0.0
    %181 = vmatpush1.msra.mxu0 0.0
    %182 = vmatprep.subr.mxu0 0.0
    %183 = vmatpush1.msra.mxu0 0.0
    %184 = vmatprep.subr.mxu0 0.0
    %185 = vmatpush1.msra.mxu0 0.0
    %186 = vmatprep.subr.mxu0 0.0
    %187 = vmatpush1.msra.mxu0 0.0
    %188 = vmatprep.subr.mxu0 0.0
    %189 = vmatpush1.msra.mxu0 0.0
    %190 = vmatprep.subr.mxu0 0.0
    %191 = vmatpush1.msra.mxu0 0.0
    %192 = vmatprep.subr.mxu0 0.0
    %193 = vmatpush1.msra.mxu0 0.0
    %194 = vmatprep.subr.mxu0 0.0
    %195 = vmatpush1.msra.mxu0 0.0
    %196 = vmatprep.subr.mxu0 0.0
    %197 = vmatpush1.msra.mxu0 0.0
    %198 = vmatprep.subr.mxu0 0.0
    %199 = vmatpush1.msra.mxu0 0.0
    %200 = vmatprep.subr.mxu0 0.0
    %201 = vmatpush1.msra.mxu0 %v99
    %202 = vmatprep.subr.mxu0 0.0
    %203 = vmatpush1.msra.mxu0 %v96
    %204 = vmatprep.subr.mxu0 0.0
    %205 = vmatpush1.msra.mxu0 %v93
    %206 = vmatprep.subr.mxu0 0.0
    %207 = vmatpush1.msra.mxu0 %v90
    %208 = vmatprep.subr.mxu0 0.0
    %209 = vmatpush2.msra.mxu0 0.0
    %210 = vmatprep.subr.mxu0 0.0
    %211 = vmatpush2.msra.mxu0 0.0
    %212 = vmatprep.subr.mxu0 0.0
    %213 = vmatpush2.msra.mxu0 0.0
    %214 = vmatprep.subr.mxu0 0.0
    %215 = vmatpush2.msra.mxu0 0.0
    %216 = vmatprep.subr.mxu0 0.0
    %217 = vmatpush2.msra.mxu0 0.0
    %218 = vmatprep.subr.mxu0 0.0
    %219 = vmatpush2.msra.mxu0 0.0
    %220 = vmatprep.subr.mxu0 0.0
    %221 = vmatpush2.msra.mxu0 0.0
    %222 = vmatprep.subr.mxu0 0.0
    %223 = vmatpush2.msra.mxu0 0.0
    %224 = vmatprep.subr.mxu0 0.0
    %225 = vmatpush2.msra.mxu0 0.0
    %226 = vmatprep.subr.mxu0 0.0
    %227 = vmatpush2.msra.mxu0 0.0
    %228 = vmatprep.subr.mxu0 0.0
    %229 = vmatpush2.msra.mxu0 0.0
    %230 = vmatprep.subr.mxu0 0.0
    %231 = vmatpush2.msra.mxu0 0.0
    %232 = vmatprep.subr.mxu0 0.0
    %233 = vmatpush2.msra.mxu0 0.0
    %234 = vmatprep.subr.mxu0 0.0
    %235 = vmatpush2.msra.mxu0 0.0
    %236 = vmatprep.subr.mxu0 0.0
    %237 = vmatpush2.msra.mxu0 0.0
    %238 = vmatprep.subr.mxu0 0.0
    %239 = vmatpush2.msra.mxu0 0.0
    %240 = vmatprep.mubr.f32.mxu0 0.0
    %241 = vmatmul.mubr.f32.gmra.mxu0 %v103
    %v242 = vpop.f32.mrf.mxu0
    %v243 = vadd.f32 0.0, %v242
    %v244 = vpop.f32.mrf.mxu0
    %245 = vdwg.mxu0
    %v246 = vld [vmem:[%s2] sm:$0x7]
    %v247 = vmul.f32 %v172, 2.0
    %v248 = vmul.f32 %v174, 2.0
    %v249 = vmul.f32 %v243, 2.0
    %v251 = vlaneseq
    %v252 = vshrl.u32 %v251, 7
    %v253 = vsub.s32 0, %v252
    %v254 = vrot.slane %v246, %v253
    %v255 = vlaneseq
    %v256 = vshrl.u32 %v255, 7
    %v257 = vsub.s32 1, %v256
    %v258 = vrot.slane %v246, %v257
    %v259 = vlaneseq
    %v260 = vshrl.u32 %v259, 7
    %v261 = vsub.s32 2, %v260
    %v262 = vrot.slane %v246, %v261
    %v266 = vsub.f32 %v254, %v247
    %v267 = vsub.f32 %v258, %v248
    %v268 = vsub.f32 %v262, %v249
    %v269 = vlaneseq
    %v270 = vand.u32 %v269, 127
    %v271 = vadd.s32 %v270, 128
    %v272 = vadd.s32 %v270, 256
    %v273 = vmin.f32 %v266, %v267
    %v274 = vmin.f32 %v273, %v268
    %275 = vmin.xlane.f32.xlu0 %v274
    %v276 = vpop.xlane.xlu0 %275
    %vm277 = vcmp.le.f32.partialorder %v266, %v276
    %vm278 = vcmp.le.f32.partialorder %v267, %v276
    %vm279 = vcmp.le.f32.partialorder %v268, %v276
    %v280 = vsel %vm277, %v270, 2147483647
    %v281 = vsel %vm278, %v271, 2147483647
    %v282 = vsel %vm279, %v272, 2147483647
    %vm283 = vcmp.lt.s32.totalorder %v280, %v281
    %v284 = vsel %vm283, %v280, %v281
    %vm285 = vcmp.lt.s32.totalorder %v284, %v282
    %v286 = vsel %vm285, %v284, %v282
    %v287 = vand.u32 %v286, 65535
    %v288 = vshra.s32 %v286, 16
    %v289 = vcvt.s32.f32 %v287
    %v290 = vcvt.s32.f32 %v288
    %291 = vmin.xlane.f32.xlu0 %v290
    %v292 = vpop.xlane.xlu0 %291
    %vm293 = vcmp.eq.f32.partialorder %v290, %v292
    %v294 = vsel %vm293, %v289, inf
    %295 = vmin.xlane.f32.xlu0 %v294
    %v296 = vpop.xlane.xlu0 %295
    %v297 = vcvt.f32.s32 %v296
    %v298 = vcvt.f32.s32 %v292
    %v299 = vshll.u32 %v298, 16
    %v300 = vadd.s32 %v299, %v297
    %vm301 = vcmp.eq.s32.totalorder %v270, %v300
    %vm302 = vcmp.eq.s32.totalorder %v271, %v300
    %vm303 = vcmp.eq.s32.totalorder %v272, %v300
    %v304 = vsel %vm301, 1, 0
    %v305 = vsel %vm302, 1, 0
    %v306 = vsel %vm303, 1, 0
    %v307 = vcvt.s32.f32 %v304
    %v308 = vcvt.s32.f32 %v305
    %v309 = vcvt.s32.f32 %v306
    %310 = vmatprep.subr.mxu0 0.0
    %311 = vmatpush1.xpose.msra.mxu0 0.0
    %312 = vmatprep.subr.mxu0 0.0
    %313 = vmatpush1.xpose.msra.mxu0 0.0
    %314 = vmatprep.subr.mxu0 0.0
    %315 = vmatpush1.xpose.msra.mxu0 0.0
    %316 = vmatprep.subr.mxu0 0.0
    %317 = vmatpush1.xpose.msra.mxu0 0.0
    %318 = vmatprep.subr.mxu0 0.0
    %319 = vmatpush1.xpose.msra.mxu0 0.0
    %320 = vmatprep.subr.mxu0 0.0
    %321 = vmatpush1.xpose.msra.mxu0 0.0
    %322 = vmatprep.subr.mxu0 0.0
    %323 = vmatpush1.xpose.msra.mxu0 0.0
    %324 = vmatprep.subr.mxu0 0.0
    %325 = vmatpush1.xpose.msra.mxu0 0.0
    %326 = vmatprep.subr.mxu0 0.0
    %327 = vmatpush1.xpose.msra.mxu0 0.0
    %328 = vmatprep.subr.mxu0 0.0
    %329 = vmatpush1.xpose.msra.mxu0 0.0
    %330 = vmatprep.subr.mxu0 0.0
    %331 = vmatpush1.xpose.msra.mxu0 0.0
    %332 = vmatprep.subr.mxu0 0.0
    %333 = vmatpush1.xpose.msra.mxu0 0.0
    %334 = vmatprep.subr.mxu0 %v98
    %335 = vmatpush1.xpose.msra.mxu0 %v97
    %336 = vmatprep.subr.mxu0 %v95
    %337 = vmatpush1.xpose.msra.mxu0 %v94
    %338 = vmatprep.subr.mxu0 %v92
    %339 = vmatpush1.xpose.msra.mxu0 %v91
    %340 = vmatprep.subr.mxu0 %v89
    %341 = vmatpush1.xpose.msra.mxu0 %v88
    %342 = vmatprep.subr.mxu0 0.0
    %343 = vmatpush2.xpose.msra.mxu0 0.0
    %344 = vmatprep.subr.mxu0 0.0
    %345 = vmatpush2.xpose.msra.mxu0 0.0
    %346 = vmatprep.subr.mxu0 0.0
    %347 = vmatpush2.xpose.msra.mxu0 0.0
    %348 = vmatprep.subr.mxu0 0.0
    %349 = vmatpush2.xpose.msra.mxu0 0.0
    %350 = vmatprep.subr.mxu0 0.0
    %351 = vmatpush2.xpose.msra.mxu0 0.0
    %352 = vmatprep.subr.mxu0 0.0
    %353 = vmatpush2.xpose.msra.mxu0 0.0
    %354 = vmatprep.subr.mxu0 0.0
    %355 = vmatpush2.xpose.msra.mxu0 0.0
    %356 = vmatprep.subr.mxu0 0.0
    %357 = vmatpush2.xpose.msra.mxu0 0.0
    %358 = vmatprep.subr.mxu0 0.0
    %359 = vmatpush2.xpose.msra.mxu0 0.0
    %360 = vmatprep.subr.mxu0 0.0
    %361 = vmatpush2.xpose.msra.mxu0 0.0
    %362 = vmatprep.subr.mxu0 0.0
    %363 = vmatpush2.xpose.msra.mxu0 0.0
    %364 = vmatprep.subr.mxu0 0.0
    %365 = vmatpush2.xpose.msra.mxu0 0.0
    %366 = vmatprep.subr.mxu0 0.0
    %367 = vmatpush2.xpose.msra.mxu0 0.0
    %368 = vmatprep.subr.mxu0 0.0
    %369 = vmatpush2.xpose.msra.mxu0 0.0
    %370 = vmatprep.subr.mxu0 0.0
    %371 = vmatpush2.xpose.msra.mxu0 0.0
    %372 = vmatprep.subr.mxu0 0.0
    %373 = vmatpush2.xpose.msra.mxu0 0.0
    %374 = vmatprep.mubr.f32.mxu0 %v308
    %375 = vmatmul.mubr.f32.gmra.mxu0 %v307
    %v376 = vpop.f32.mrf.mxu0
    %v377 = vadd.f32 0.0, %v376
    %v378 = vpop.f32.mrf.mxu0
    %379 = vdwg.mxu0
    %380 = vmatprep.subr.mxu0 0.0
    %381 = vmatpush1.xpose.msra.mxu0 0.0
    %382 = vmatprep.subr.mxu0 0.0
    %383 = vmatpush1.xpose.msra.mxu0 0.0
    %384 = vmatprep.subr.mxu0 0.0
    %385 = vmatpush1.xpose.msra.mxu0 0.0
    %386 = vmatprep.subr.mxu0 0.0
    %387 = vmatpush1.xpose.msra.mxu0 0.0
    %388 = vmatprep.subr.mxu0 0.0
    %389 = vmatpush1.xpose.msra.mxu0 0.0
    %390 = vmatprep.subr.mxu0 0.0
    %391 = vmatpush1.xpose.msra.mxu0 0.0
    %392 = vmatprep.subr.mxu0 0.0
    %393 = vmatpush1.xpose.msra.mxu0 0.0
    %394 = vmatprep.subr.mxu0 0.0
    %395 = vmatpush1.xpose.msra.mxu0 0.0
    %396 = vmatprep.subr.mxu0 0.0
    %397 = vmatpush1.xpose.msra.mxu0 0.0
    %398 = vmatprep.subr.mxu0 0.0
    %399 = vmatpush1.xpose.msra.mxu0 0.0
    %400 = vmatprep.subr.mxu0 0.0
    %401 = vmatpush1.xpose.msra.mxu0 0.0
    %402 = vmatprep.subr.mxu0 0.0
    %403 = vmatpush1.xpose.msra.mxu0 0.0
    %404 = vmatprep.subr.mxu0 0.0
    %405 = vmatpush1.xpose.msra.mxu0 %v99
    %406 = vmatprep.subr.mxu0 0.0
    %407 = vmatpush1.xpose.msra.mxu0 %v96
    %408 = vmatprep.subr.mxu0 0.0
    %409 = vmatpush1.xpose.msra.mxu0 %v93
    %410 = vmatprep.subr.mxu0 0.0
    %411 = vmatpush1.xpose.msra.mxu0 %v90
    %412 = vmatprep.subr.mxu0 0.0
    %413 = vmatpush2.xpose.msra.mxu0 0.0
    %414 = vmatprep.subr.mxu0 0.0
    %415 = vmatpush2.xpose.msra.mxu0 0.0
    %416 = vmatprep.subr.mxu0 0.0
    %417 = vmatpush2.xpose.msra.mxu0 0.0
    %418 = vmatprep.subr.mxu0 0.0
    %419 = vmatpush2.xpose.msra.mxu0 0.0
    %420 = vmatprep.subr.mxu0 0.0
    %421 = vmatpush2.xpose.msra.mxu0 0.0
    %422 = vmatprep.subr.mxu0 0.0
    %423 = vmatpush2.xpose.msra.mxu0 0.0
    %424 = vmatprep.subr.mxu0 0.0
    %425 = vmatpush2.xpose.msra.mxu0 0.0
    %426 = vmatprep.subr.mxu0 0.0
    %427 = vmatpush2.xpose.msra.mxu0 0.0
    %428 = vmatprep.subr.mxu0 0.0
    %429 = vmatpush2.xpose.msra.mxu0 0.0
    %430 = vmatprep.subr.mxu0 0.0
    %431 = vmatpush2.xpose.msra.mxu0 0.0
    %432 = vmatprep.subr.mxu0 0.0
    %433 = vmatpush2.xpose.msra.mxu0 0.0
    %434 = vmatprep.subr.mxu0 0.0
    %435 = vmatpush2.xpose.msra.mxu0 0.0
    %436 = vmatprep.subr.mxu0 0.0
    %437 = vmatpush2.xpose.msra.mxu0 0.0
    %438 = vmatprep.subr.mxu0 0.0
    %439 = vmatpush2.xpose.msra.mxu0 0.0
    %440 = vmatprep.subr.mxu0 0.0
    %441 = vmatpush2.xpose.msra.mxu0 0.0
    %442 = vmatprep.subr.mxu0 0.0
    %443 = vmatpush2.xpose.msra.mxu0 0.0
    %444 = vmatprep.mubr.f32.mxu0 0.0
    %445 = vmatmul.mubr.f32.gmra.mxu0 %v309
    %v446 = vpop.f32.mrf.mxu0
    %v447 = vadd.f32 %v377, %v446
    %v448 = vpop.f32.mrf.mxu0
    %449 = vdwg.mxu0
    %v450 = vld [vmem:[#allocation2] sm:$0xff]
    %vm451 = vcmp.lt.f32.partialorder %v276, %v450
    %v452 = vld [vmem:[#allocation3] sm:$0xff]
    %v453 = vsel %vm451, 1, 0
    %454 = vset.pattern.permute.xlu0 0
    %455 = vperm.xlu0 %454, %v453
    %v456 = vpop.permute.xlu0 %455
    %vm457 = vcmp.eq.s32.totalorder %v456, 1
    %v458 = vsel %vm457, %v447, %v452
    %459 = vst.msk [vmem:[#allocation3] sm:$0xff] %vm101, %v458
    %v460 = vld [vmem:[#allocation2] sm:$0xff]
    %v461 = vsel %vm451, %v276, %v460
    %vm462 = vcmask 7168
    %463 = vst.msk [vmem:[#allocation2] sm:$0xff] %vm462, %v461
    // Predicated region
    $region50: #{tpu_custom_call.1} parent=1 // pred_check
      %p464 = pneg %p80
    $region51: #{tpu_custom_call.1} parent=1 // pred_check_branch
      %466 = sbr.rel (%p464) target = $region53
    $region52: #{tpu_custom_call.1} parent=1 // pred_region
      %v467 = vld [vmem:[#allocation3] sm:$0xff]
      %v468 = vld [vmem:[#allocation9] sm:$0xff]
      %v469 = vld [vmem:[#allocation9 + $0x8] sm:$0xff]
      %v470 = vld [vmem:[#allocation9 + $0x10] sm:$0xff]
      %v471 = vld [vmem:[#allocation9 + $0x18] sm:$0xff]
      %v472 = vld [vmem:[%s4] sm:$0x1]
      %v474 = vlaneseq
      %v475 = vshrl.u32 %v474, 7
      %v476 = vsub.s32 0, %v475
      %v477 = vrot.slane %v472, %v476
      %v480 = vsel %vm101, %v467, 0
      %482 = vmatprep.subr.mxu0 0.0
      %483 = vmatpush1.msra.mxu0 0.0
      %484 = vmatprep.subr.mxu0 0.0
      %485 = vmatpush1.msra.mxu0 0.0
      %486 = vmatprep.subr.mxu0 0.0
      %487 = vmatpush1.msra.mxu0 0.0
      %488 = vmatprep.subr.mxu0 0.0
      %489 = vmatpush1.msra.mxu0 0.0
      %490 = vmatprep.subr.mxu0 0.0
      %491 = vmatpush1.msra.mxu0 0.0
      %492 = vmatprep.subr.mxu0 0.0
      %493 = vmatpush1.msra.mxu0 0.0
      %494 = vmatprep.subr.mxu0 0.0
      %495 = vmatpush1.msra.mxu0 0.0
      %496 = vmatprep.subr.mxu0 0.0
      %497 = vmatpush1.msra.mxu0 0.0
      %498 = vmatprep.subr.mxu0 0.0
      %499 = vmatpush1.msra.mxu0 0.0
      %500 = vmatprep.subr.mxu0 0.0
      %501 = vmatpush1.msra.mxu0 0.0
      %502 = vmatprep.subr.mxu0 0.0
      %503 = vmatpush1.msra.mxu0 0.0
      %504 = vmatprep.subr.mxu0 0.0
      %505 = vmatpush1.msra.mxu0 0.0
      %506 = vmatprep.subr.mxu0 0.0
      %507 = vmatpush1.msra.mxu0 %v471
      %508 = vmatprep.subr.mxu0 0.0
      %509 = vmatpush1.msra.mxu0 %v470
      %510 = vmatprep.subr.mxu0 0.0
      %511 = vmatpush1.msra.mxu0 %v469
      %512 = vmatprep.subr.mxu0 0.0
      %513 = vmatpush1.msra.mxu0 %v468
      %514 = vmatprep.subr.mxu0 0.0
      %515 = vmatpush2.msra.mxu0 0.0
      %516 = vmatprep.subr.mxu0 0.0
      %517 = vmatpush2.msra.mxu0 0.0
      %518 = vmatprep.subr.mxu0 0.0
      %519 = vmatpush2.msra.mxu0 0.0
      %520 = vmatprep.subr.mxu0 0.0
      %521 = vmatpush2.msra.mxu0 0.0
      %522 = vmatprep.subr.mxu0 0.0
      %523 = vmatpush2.msra.mxu0 0.0
      %524 = vmatprep.subr.mxu0 0.0
      %525 = vmatpush2.msra.mxu0 0.0
      %526 = vmatprep.subr.mxu0 0.0
      %527 = vmatpush2.msra.mxu0 0.0
      %528 = vmatprep.subr.mxu0 0.0
      %529 = vmatpush2.msra.mxu0 0.0
      %530 = vmatprep.subr.mxu0 0.0
      %531 = vmatpush2.msra.mxu0 0.0
      %532 = vmatprep.subr.mxu0 0.0
      %533 = vmatpush2.msra.mxu0 0.0
      %534 = vmatprep.subr.mxu0 0.0
      %535 = vmatpush2.msra.mxu0 0.0
      %536 = vmatprep.subr.mxu0 0.0
      %537 = vmatpush2.msra.mxu0 0.0
      %538 = vmatprep.subr.mxu0 0.0
      %539 = vmatpush2.msra.mxu0 0.0
      %540 = vmatprep.subr.mxu0 0.0
      %541 = vmatpush2.msra.mxu0 0.0
      %542 = vmatprep.subr.mxu0 0.0
      %543 = vmatpush2.msra.mxu0 0.0
      %544 = vmatprep.subr.mxu0 0.0
      %545 = vmatpush2.msra.mxu0 0.0
      %546 = vmatprep.mubr.f32.mxu0 0.0
      %547 = vmatmul.mubr.f32.gmra.mxu0 %v480
      %v548 = vpop.f32.mrf.mxu0
      %v549 = vadd.f32 %v477, %v548
      %v550 = vpop.f32.mrf.mxu0
      %551 = vdwg.mxu0
      %v552 = vmax.f32 %v549, 0.0
      %v553 = vld [vmem:[#allocation10] sm:$0xff]
      %v554 = vld [vmem:[#allocation10 + $0x8] sm:$0xff]
      %v555 = vld [vmem:[#allocation10 + $0x10] sm:$0xff]
      %v556 = vld [vmem:[#allocation10 + $0x18] sm:$0xff]
      %v557 = vld [vmem:[#allocation10 + $0x20] sm:$0xff]
      %v558 = vld [vmem:[#allocation10 + $0x28] sm:$0xff]
      %v559 = vld [vmem:[#allocation10 + $0x30] sm:$0xff]
      %v560 = vld [vmem:[#allocation10 + $0x38] sm:$0xff]
      %v561 = vld [vmem:[#allocation10 + $0x40] sm:$0xff]
      %v562 = vld [vmem:[#allocation10 + $0x48] sm:$0xff]
      %v563 = vld [vmem:[#allocation10 + $0x50] sm:$0xff]
      %v564 = vld [vmem:[#allocation10 + $0x58] sm:$0xff]
      %v565 = vld [vmem:[#allocation10 + $0x60] sm:$0xff]
      %v566 = vld [vmem:[#allocation10 + $0x68] sm:$0xff]
      %v567 = vld [vmem:[#allocation10 + $0x70] sm:$0xff]
      %v568 = vld [vmem:[#allocation10 + $0x78] sm:$0xff]
      %v569 = vld [vmem:[%s6] sm:$0x1]
      %v571 = vlaneseq
      %v572 = vshrl.u32 %v571, 7
      %v573 = vsub.s32 0, %v572
      %v574 = vrot.slane %v569, %v573
      %576 = vmatprep.subr.mxu0 0.0
      %577 = vmatpush1.msra.mxu0 %v568
      %578 = vmatprep.subr.mxu0 0.0
      %579 = vmatpush1.msra.mxu0 %v567
      %580 = vmatprep.subr.mxu0 0.0
      %581 = vmatpush1.msra.mxu0 %v566
      %582 = vmatprep.subr.mxu0 0.0
      %583 = vmatpush1.msra.mxu0 %v565
      %584 = vmatprep.subr.mxu0 0.0
      %585 = vmatpush1.msra.mxu0 %v564
      %586 = vmatprep.subr.mxu0 0.0
      %587 = vmatpush1.msra.mxu0 %v563
      %588 = vmatprep.subr.mxu0 0.0
      %589 = vmatpush1.msra.mxu0 %v562
      %590 = vmatprep.subr.mxu0 0.0
      %591 = vmatpush1.msra.mxu0 %v561
      %592 = vmatprep.subr.mxu0 0.0
      %593 = vmatpush1.msra.mxu0 %v560
      %594 = vmatprep.subr.mxu0 0.0
      %595 = vmatpush1.msra.mxu0 %v559
      %596 = vmatprep.subr.mxu0 0.0
      %597 = vmatpush1.msra.mxu0 %v558
      %598 = vmatprep.subr.mxu0 0.0
      %599 = vmatpush1.msra.mxu0 %v557
      %600 = vmatprep.subr.mxu0 0.0
      %601 = vmatpush1.msra.mxu0 %v556
      %602 = vmatprep.subr.mxu0 0.0
      %603 = vmatpush1.msra.mxu0 %v555
      %604 = vmatprep.subr.mxu0 0.0
      %605 = vmatpush1.msra.mxu0 %v554
      %606 = vmatprep.subr.mxu0 0.0
      %607 = vmatpush1.msra.mxu0 %v553
      %608 = vmatprep.subr.mxu0 0.0
      %609 = vmatpush2.msra.mxu0 0.0
      %610 = vmatprep.subr.mxu0 0.0
      %611 = vmatpush2.msra.mxu0 0.0
      %612 = vmatprep.subr.mxu0 0.0
      %613 = vmatpush2.msra.mxu0 0.0
      %614 = vmatprep.subr.mxu0 0.0
      %615 = vmatpush2.msra.mxu0 0.0
      %616 = vmatprep.subr.mxu0 0.0
      %617 = vmatpush2.msra.mxu0 0.0
      %618 = vmatprep.subr.mxu0 0.0
      %619 = vmatpush2.msra.mxu0 0.0
      %620 = vmatprep.subr.mxu0 0.0
      %621 = vmatpush2.msra.mxu0 0.0
      %622 = vmatprep.subr.mxu0 0.0
      %623 = vmatpush2.msra.mxu0 0.0
      %624 = vmatprep.subr.mxu0 0.0
      %625 = vmatpush2.msra.mxu0 0.0
      %626 = vmatprep.subr.mxu0 0.0
      %627 = vmatpush2.msra.mxu0 0.0
      %628 = vmatprep.subr.mxu0 0.0
      %629 = vmatpush2.msra.mxu0 0.0
      %630 = vmatprep.subr.mxu0 0.0
      %631 = vmatpush2.msra.mxu0 0.0
      %632 = vmatprep.subr.mxu0 0.0
      %633 = vmatpush2.msra.mxu0 0.0
      %634 = vmatprep.subr.mxu0 0.0
      %635 = vmatpush2.msra.mxu0 0.0
      %636 = vmatprep.subr.mxu0 0.0
      %637 = vmatpush2.msra.mxu0 0.0
      %638 = vmatprep.subr.mxu0 0.0
      %639 = vmatpush2.msra.mxu0 0.0
      %640 = vmatprep.mubr.f32.mxu0 0.0
      %641 = vmatmul.mubr.f32.gmra.mxu0 %v552
      %v642 = vpop.f32.mrf.mxu0
      %v643 = vadd.f32 %v574, %v642
      %v644 = vpop.f32.mrf.mxu0
      %645 = vdwg.mxu0
      %646 = vst [vmem:[#allocation12] sm:$0xff] %v643
    $region53: #{tpu_custom_call.1} parent=1 // pred_fallthru
      _
    // Predicated region
    $region54: #{tpu_custom_call.1} parent=1 // pred_check
      _
    $region55: #{tpu_custom_call.1} parent=1 // pred_check_branch
      %648 = sbr.rel (0) target = $region57
    $region56: #{tpu_custom_call.1} parent=1 // pred_region
      %s650 = ssub.s32 128, 128
      %651 = vsyncadd [#allocation6], %s650
      %s653 = sshll.u32 [#allocation12], 4
      %s654 = int_to_ptr.vmem [resolvable:$true] %s653
      %656 = dma.vmem_to_hbm [thread:$0]  %s654, 128, %s7, [#allocation6]
    $region57: #{tpu_custom_call.1} parent=1 // pred_fallthru
      _
    // Predicated region
    $region58: #{tpu_custom_call.1} parent=1 // pred_check
      _
    $region59: #{tpu_custom_call.1} parent=1 // pred_check_branch
      %658 = sbr.rel (0) target = $region61
    $region60: #{tpu_custom_call.1} parent=1 // pred_region
      %659 = dma.done [#allocation6], 128
    $region61: #{tpu_custom_call.1} parent=1 // pred_fallthru
      _
    %660 = vsyncpa [#allocation5], 1
    %661 = vsyncpa [#allocation8], 1
    %662 = vsyncpa [#allocation11], 1
    %663 = vsyncpa [#allocation6], 1

</llo_original>
